<compile_context>
chip_gen: v7x
topology: tpu7x:2x2x1
jax: 0.10.0
libtpu: 0.0.40
codegen_flags: <defaults>
</compile_context>

<pallas_src>
import functools

import jax
import jax.numpy as jnp
from jax.experimental import pallas as pl
from jax.experimental.pallas import tpu as pltpu


# ---- f32 aux block row layout (16 rows x 128 lanes, ~8 KB) ------------------
#   rows 0..2 : Ws[k, :]  in lanes 0:64   (fc_s weight rows, zero elsewhere)
#   row  3    : Wa[0, :]  in lanes 64:128 (fc_a weight row,  zero elsewhere)
#   row  4    : [bs | ba]
#   row  5    : b1
#   row  6    : [b2 | 0]
#   row  7    : [wo | 0]
#   row  8    : bo at lane 0
_AUX_ROWS = 16


def _round_up(x, m):
    return ((x + m - 1) // m) * m


def qnetwork_kernel(s_ref, a_ref, aux_ref, w1_ref, w2_ref, out_ref):
    s = s_ref[...]                                  # (TB, 3)  f32
    a = a_ref[...]                                  # (TB, 1)  f32
    aux = aux_ref[...]                              # (16, 128) f32

    ws0 = aux[0:1, :]                               # (1, 128) lanes 64: zero
    ws1 = aux[1:2, :]
    ws2 = aux[2:3, :]
    wa0 = aux[3:4, :]                               # (1, 128) lanes :64 zero
    b_sa = aux[4:5, :]                              # (1, 128)  [bs | ba]
    b1 = aux[5:6, :]                                # (1, 128)
    b2 = aux[6:7, 0:64]                             # (1, 64)
    wo = aux[7:8, 0:64]                             # (1, 64)
    bo = aux[8:9, 0:1]                              # (1, 1)

    # Layer 1: h = concat(relu(fc_s(state)), relu(fc_a(action))).
    # K is only 4, so do it as lane-broadcast multiply-adds on the VPU instead
    # of spending a full M-scaled MXU pass.  Block-diagonal padding of the
    # weight rows reproduces the concat exactly.
    h = (s[:, 0:1] * ws0 + s[:, 1:2] * ws1 + s[:, 2:3] * ws2
         + a[:, 0:1] * wa0 + b_sa)
    h = jnp.maximum(h, 0.0)                         # (TB, 128) f32

    # Q = relu(fc1(h))  -- bf16 MXU matmul, f32 accumulation.
    q = jnp.dot(h.astype(jnp.bfloat16), w1_ref[...],
                preferred_element_type=jnp.float32) + b1
    q = jnp.maximum(q, 0.0)                         # (TB, 128) f32

    # Q = relu(fc2(Q))  -- bf16 MXU matmul, f32 accumulation, true width 64.
    q = jnp.dot(q.astype(jnp.bfloat16), w2_ref[...],
                preferred_element_type=jnp.float32) + b2
    q = jnp.maximum(q, 0.0)                         # (TB, 64) f32

    # out = Q @ wo + bo as VPU multiply + XLU lane reduction (no N=1 matmul).
    out_ref[...] = jnp.sum(q * wo, axis=-1, keepdims=True) + bo   # (TB, 1)


def pack_params(p):
    """Pack params: f32 aux block (16,128) + bf16 MXU weights w1/w2."""
    f32 = jnp.float32
    aux = jnp.zeros((_AUX_ROWS, 128), f32)
    aux = aux.at[0, 0:64].set(p["ws"][0].astype(f32))
    aux = aux.at[1, 0:64].set(p["ws"][1].astype(f32))
    aux = aux.at[2, 0:64].set(p["ws"][2].astype(f32))
    aux = aux.at[3, 64:128].set(p["wa"][0].astype(f32))
    aux = aux.at[4, 0:64].set(p["bs"][0].astype(f32))
    aux = aux.at[4, 64:128].set(p["ba"][0].astype(f32))
    aux = aux.at[5, :].set(p["b1"][0].astype(f32))
    aux = aux.at[6, 0:64].set(p["b2"][0].astype(f32))
    aux = aux.at[7, 0:64].set(p["wo"][:, 0].astype(f32))
    aux = aux.at[8, 0].set(p["bo"][0, 0].astype(f32))

    w1 = p["w1"].astype(jnp.bfloat16)               # (128, 128)
    w2 = p["w2"].astype(jnp.bfloat16)               # (128, 64)
    return aux, w1, w2


@functools.partial(jax.jit, static_argnames=("batch_tile",))
def qnetwork_forward(state, action, aux, w1, w2, *, batch_tile=1024):
    """state: (B, 3), action: (B, 1) -> (B, 1) f32."""
    B = state.shape[0]
    state = state.astype(jnp.float32)
    action = action.astype(jnp.float32)

    # Large tile to amortize per-step overhead, but keep >= 2 grid steps when
    # B allows so v7x can split the "parallel" batch axis across its 2 TCs.
    tb = min(batch_tile, _round_up(max((B + 1) // 2, 8), 8))
    b_pad = _round_up(B, tb)
    if b_pad != B:
        state = jnp.pad(state, ((0, b_pad - B), (0, 0)))
        action = jnp.pad(action, ((0, b_pad - B), (0, 0)))
    grid = (b_pad // tb,)

    flops = 2 * b_pad * (4 * 128 + 128 * 128 + 128 * 64 + 64)
    bytes_accessed = ((state.size + action.size + aux.size) * 4
                      + (w1.size + w2.size) * 2 + b_pad * 4)

    out = pl.pallas_call(
        qnetwork_kernel,
        out_shape=jax.ShapeDtypeStruct((b_pad, 1), jnp.float32),
        grid=grid,
        in_specs=[
            pl.BlockSpec((tb, 3), lambda i: (i, 0)),            # state tile
            pl.BlockSpec((tb, 1), lambda i: (i, 0)),            # action tile
            pl.BlockSpec((_AUX_ROWS, 128), lambda i: (0, 0)),   # resident aux
            pl.BlockSpec((128, 128), lambda i: (0, 0)),         # resident w1
            pl.BlockSpec((128, 64), lambda i: (0, 0)),          # resident w2
        ],
        out_specs=pl.BlockSpec((tb, 1), lambda i: (i, 0)),
        compiler_params=pltpu.CompilerParams(
            dimension_semantics=("parallel",),
            vmem_limit_bytes=32 * 1024 * 1024,
        ),
        cost_estimate=pl.CostEstimate(
            flops=flops, transcendentals=0, bytes_accessed=bytes_accessed),
    )(state, action, aux, w1, w2)
    return out[:B]


def init_params(key):
    """PyTorch nn.Linear default init: U(-1/sqrt(fan_in), +1/sqrt(fan_in))."""
    def linear(k, fan_in, fan_out):
        kw, kb = jax.random.split(k)
        bound = 1.0 / jnp.sqrt(jnp.float32(fan_in))
        w = jax.random.uniform(kw, (fan_in, fan_out), jnp.float32, -bound, bound)
        b = jax.random.uniform(kb, (1, fan_out), jnp.float32, -bound, bound)
        return w, b

    ks = jax.random.split(key, 5)
    ws, bs = linear(ks[0], 3, 64)      # fc_s
    wa, ba = linear(ks[1], 1, 64)      # fc_a
    w1, b1 = linear(ks[2], 128, 128)   # fc1
    w2, b2 = linear(ks[3], 128, 64)    # fc2
    wo, bo = linear(ks[4], 64, 1)      # out
    return dict(ws=ws, bs=bs, wa=wa, ba=ba, w1=w1, b1=b1,
                w2=w2, b2=b2, wo=wo, bo=bo)


def qnetwork_ref(state, action, p):
    """Pure-JAX f32 reference (unpacked params) for correctness check."""
    hp = jax.lax.Precision.HIGHEST
    h1 = jax.nn.relu(jnp.dot(state, p["ws"], precision=hp) + p["bs"])
    h2 = jax.nn.relu(jnp.dot(action, p["wa"], precision=hp) + p["ba"])
    h = jnp.concatenate([h1, h2], axis=-1)
    q = jax.nn.relu(jnp.dot(h, p["w1"], precision=hp) + p["b1"])
    q = jax.nn.relu(jnp.dot(q, p["w2"], precision=hp) + p["b2"])
    return jnp.dot(q, p["wo"], precision=hp) + p["bo"]


if __name__ == "__main__":
    key = jax.random.PRNGKey(0)
    k_param, k_s, k_a, k_s2, k_a2 = jax.random.split(key, 5)

    params = init_params(k_param)
    aux, w1, w2 = pack_params(params)

    # Small-batch check (single grid step).  bf16 matmuls with f32
    # accumulation -> loosened tolerance vs the f32 reference.
    B = 8
    state = jax.random.normal(k_s, (B, 3), jnp.float32)
    action = jax.random.normal(k_a, (B, 1), jnp.float32)
    out = jax.block_until_ready(qnetwork_forward(state, action, aux, w1, w2))
    ref = qnetwork_ref(state, action, params)
    assert out.shape == (B, 1), out.shape
    assert jnp.allclose(out, ref, atol=5e-2, rtol=5e-2), (out, ref)

    # Multi-tile + batch-padding check (exercises the grid path).
    B2 = 300
    state2 = jax.random.normal(k_s2, (B2, 3), jnp.float32)
    action2 = jax.random.normal(k_a2, (B2, 1), jnp.float32)
    out2 = jax.block_until_ready(qnetwork_forward(state2, action2, aux, w1, w2))
    ref2 = qnetwork_ref(state2, action2, params)
    assert out2.shape == (B2, 1), out2.shape
    assert jnp.allclose(out2, ref2, atol=5e-2, rtol=5e-2)

    print("KERNEL_OK")
</pallas_src>

<mosaic_0001>
module attributes {stable_mosaic.version = 11 : i64} {
  func.func @qnetwork_kernel(%arg0: i32, %arg1: memref<8x3xf32, #tpu.memory_space<vmem>>, %arg2: memref<8x1xf32, #tpu.memory_space<vmem>>, %arg3: memref<16x128xf32, #tpu.memory_space<vmem>>, %arg4: memref<128x128xbf16, #tpu.memory_space<vmem>>, %arg5: memref<128x64xbf16, #tpu.memory_space<vmem>>, %arg6: memref<8x1xf32, #tpu.memory_space<vmem>>) attributes {dimension_semantics = [#tpu.dimension_semantics<parallel>], iteration_bounds = array<i64: 1>, scalar_prefetch = 0 : i64, scratch_operands = 0 : i64, tpu.core_type = #tpu.core_type<tc>, window_params = [{transform_indices = @transform_0, window_bounds = array<i64: 8, 3>}, {transform_indices = @transform_1, window_bounds = array<i64: 8, 1>}, {pipeline_mode = #tpu.pipeline_mode<synchronous>, transform_indices = @transform_2, window_bounds = array<i64: 16, 128>}, {pipeline_mode = #tpu.pipeline_mode<synchronous>, transform_indices = @transform_3, window_bounds = array<i64: 128, 128>}, {pipeline_mode = #tpu.pipeline_mode<synchronous>, transform_indices = @transform_4, window_bounds = array<i64: 128, 64>}, {transform_indices = @transform_5, window_bounds = array<i64: 8, 1>}]} {
    %c0 = arith.constant 0 : index
    %c0_0 = arith.constant 0 : index
    %0 = vector.load %arg1[%c0, %c0_0] : memref<8x3xf32, #tpu.memory_space<vmem>>, vector<8x3xf32>
    %c0_1 = arith.constant 0 : index
    %c0_2 = arith.constant 0 : index
    %1 = vector.load %arg2[%c0_1, %c0_2] : memref<8x1xf32, #tpu.memory_space<vmem>>, vector<8x1xf32>
    %c0_3 = arith.constant 0 : index
    %c0_4 = arith.constant 0 : index
    %2 = vector.load %arg3[%c0_3, %c0_4] : memref<16x128xf32, #tpu.memory_space<vmem>>, vector<16x128xf32>
    %3 = vector.extract_strided_slice %2 {offsets = [0, 0], sizes = [1, 128], strides = [1, 1]} : vector<16x128xf32> to vector<1x128xf32>
    %4 = vector.extract_strided_slice %2 {offsets = [1, 0], sizes = [1, 128], strides = [1, 1]} : vector<16x128xf32> to vector<1x128xf32>
    %5 = vector.extract_strided_slice %2 {offsets = [2, 0], sizes = [1, 128], strides = [1, 1]} : vector<16x128xf32> to vector<1x128xf32>
    %6 = vector.extract_strided_slice %2 {offsets = [3, 0], sizes = [1, 128], strides = [1, 1]} : vector<16x128xf32> to vector<1x128xf32>
    %7 = vector.extract_strided_slice %2 {offsets = [4, 0], sizes = [1, 128], strides = [1, 1]} : vector<16x128xf32> to vector<1x128xf32>
    %8 = vector.extract_strided_slice %2 {offsets = [5, 0], sizes = [1, 128], strides = [1, 1]} : vector<16x128xf32> to vector<1x128xf32>
    %9 = vector.extract_strided_slice %2 {offsets = [6, 0], sizes = [1, 64], strides = [1, 1]} : vector<16x128xf32> to vector<1x64xf32>
    %10 = vector.extract_strided_slice %2 {offsets = [7, 0], sizes = [1, 64], strides = [1, 1]} : vector<16x128xf32> to vector<1x64xf32>
    %11 = vector.extract_strided_slice %2 {offsets = [8, 0], sizes = [1, 1], strides = [1, 1]} : vector<16x128xf32> to vector<1x1xf32>
    %12 = vector.extract_strided_slice %0 {offsets = [0, 0], sizes = [8, 1], strides = [1, 1]} : vector<8x3xf32> to vector<8x1xf32>
    %13 = vector.broadcast %12 : vector<8x1xf32> to vector<8x128xf32>
    %14 = vector.broadcast %3 : vector<1x128xf32> to vector<8x128xf32>
    %15 = arith.mulf %13, %14 : vector<8x128xf32>
    %16 = vector.extract_strided_slice %0 {offsets = [0, 1], sizes = [8, 1], strides = [1, 1]} : vector<8x3xf32> to vector<8x1xf32>
    %17 = vector.broadcast %16 : vector<8x1xf32> to vector<8x128xf32>
    %18 = vector.broadcast %4 : vector<1x128xf32> to vector<8x128xf32>
    %19 = arith.mulf %17, %18 : vector<8x128xf32>
    %20 = arith.addf %15, %19 : vector<8x128xf32>
    %21 = vector.extract_strided_slice %0 {offsets = [0, 2], sizes = [8, 1], strides = [1, 1]} : vector<8x3xf32> to vector<8x1xf32>
    %22 = vector.broadcast %21 : vector<8x1xf32> to vector<8x128xf32>
    %23 = vector.broadcast %5 : vector<1x128xf32> to vector<8x128xf32>
    %24 = arith.mulf %22, %23 : vector<8x128xf32>
    %25 = arith.addf %20, %24 : vector<8x128xf32>
    %26 = vector.broadcast %1 : vector<8x1xf32> to vector<8x128xf32>
    %27 = vector.broadcast %6 : vector<1x128xf32> to vector<8x128xf32>
    %28 = arith.mulf %26, %27 : vector<8x128xf32>
    %29 = arith.addf %25, %28 : vector<8x128xf32>
    %30 = vector.broadcast %7 : vector<1x128xf32> to vector<8x128xf32>
    %31 = arith.addf %29, %30 : vector<8x128xf32>
    %cst = arith.constant 0.000000e+00 : f32
    %32 = vector.broadcast %cst : f32 to vector<8x128xf32>
    %33 = arith.maximumf %31, %32 : vector<8x128xf32>
    %34 = arith.truncf %33 : vector<8x128xf32> to vector<8x128xbf16>
    %c0_5 = arith.constant 0 : index
    %c0_6 = arith.constant 0 : index
    %35 = vector.load %arg4[%c0_5, %c0_6] : memref<128x128xbf16, #tpu.memory_space<vmem>>, vector<128x128xbf16>
    %cst_7 = arith.constant dense<0.000000e+00> : vector<8x128xf32>
    %36 = tpu.matmul %34, %35, %cst_7 {dimension_numbers = #tpu.dot_dimension_numbers<[1], [0], [0], [1], [0, 0, 1, 1], [], []>} : vector<8x128xbf16>, vector<128x128xbf16>, vector<8x128xf32> -> vector<8x128xf32>
    %37 = vector.broadcast %8 : vector<1x128xf32> to vector<8x128xf32>
    %38 = arith.addf %36, %37 : vector<8x128xf32>
    %cst_8 = arith.constant 0.000000e+00 : f32
    %39 = vector.broadcast %cst_8 : f32 to vector<8x128xf32>
    %40 = arith.maximumf %38, %39 : vector<8x128xf32>
    %41 = arith.truncf %40 : vector<8x128xf32> to vector<8x128xbf16>
    %c0_9 = arith.constant 0 : index
    %c0_10 = arith.constant 0 : index
    %42 = vector.load %arg5[%c0_9, %c0_10] : memref<128x64xbf16, #tpu.memory_space<vmem>>, vector<128x64xbf16>
    %cst_11 = arith.constant dense<0.000000e+00> : vector<8x64xf32>
    %43 = tpu.matmul %41, %42, %cst_11 {dimension_numbers = #tpu.dot_dimension_numbers<[1], [0], [0], [1], [0, 0, 1, 1], [], []>} : vector<8x128xbf16>, vector<128x64xbf16>, vector<8x64xf32> -> vector<8x64xf32>
    %44 = vector.broadcast %9 : vector<1x64xf32> to vector<8x64xf32>
    %45 = arith.addf %43, %44 : vector<8x64xf32>
    %cst_12 = arith.constant 0.000000e+00 : f32
    %46 = vector.broadcast %cst_12 : f32 to vector<8x64xf32>
    %47 = arith.maximumf %45, %46 : vector<8x64xf32>
    %48 = vector.broadcast %10 : vector<1x64xf32> to vector<8x64xf32>
    %49 = arith.mulf %47, %48 : vector<8x64xf32>
    %cst_13 = arith.constant dense<0.000000e+00> : vector<8xf32>
    %50 = vector.multi_reduction <add>, %49, %cst_13 [1] : vector<8x64xf32> to vector<8xf32>
    %51 = vector.shape_cast %50 : vector<8xf32> to vector<8x1xf32>
    %52 = vector.broadcast %11 : vector<1x1xf32> to vector<8x1xf32>
    %53 = arith.addf %51, %52 : vector<8x1xf32>
    %c0_14 = arith.constant 0 : index
    %c0_15 = arith.constant 0 : index
    %54 = vector.load %arg6[%c0_14, %c0_15] : memref<8x1xf32, #tpu.memory_space<vmem>>, vector<8x1xf32>
    tpu.vector_store %arg6[%c0_14, %c0_15], %53 {strides = array<i32>} : memref<8x1xf32, #tpu.memory_space<vmem>>, vector<8x1xf32>,
    return
  }
  func.func @transform_0(%arg0: i32) -> (i32, i32) {
    %c0_i32 = arith.constant 0 : i32
    %c0_i32_0 = arith.constant 0 : i32
    return %arg0, %c0_i32 : i32, i32
  }
  func.func @transform_1(%arg0: i32) -> (i32, i32) {
    %c0_i32 = arith.constant 0 : i32
    %c0_i32_0 = arith.constant 0 : i32
    return %arg0, %c0_i32 : i32, i32
  }
  func.func @transform_2(%arg0: i32) -> (i32, i32) {
    %c0_i32 = arith.constant 0 : i32
    %c0_i32_0 = arith.constant 0 : i32
    %c0_i32_1 = arith.constant 0 : i32
    return %c0_i32, %c0_i32_0 : i32, i32
  }
  func.func @transform_3(%arg0: i32) -> (i32, i32) {
    %c0_i32 = arith.constant 0 : i32
    %c0_i32_0 = arith.constant 0 : i32
    %c0_i32_1 = arith.constant 0 : i32
    return %c0_i32, %c0_i32_0 : i32, i32
  }
  func.func @transform_4(%arg0: i32) -> (i32, i32) {
    %c0_i32 = arith.constant 0 : i32
    %c0_i32_0 = arith.constant 0 : i32
    %c0_i32_1 = arith.constant 0 : i32
    return %c0_i32, %c0_i32_0 : i32, i32
  }
  func.func @transform_5(%arg0: i32) -> (i32, i32) {
    %c0_i32 = arith.constant 0 : i32
    %c0_i32_0 = arith.constant 0 : i32
    return %arg0, %c0_i32 : i32, i32
  }
}

</mosaic_0001>

<llo_original>
// kernel: qnetwork_forward.1
$region0: #{qnetwork_forward.1}
  #allocation0 [shape = 'u32[]', space=smem, size = 0x4, offset = 0x4, fixed_abs, tag = 'smem constant byte address 0x4 - core index']
  #allocation1 [shape = 'u32[144,128]{1,0:T(1,128)}', space=vmem, size = 0x12000, scoped, tag = 'internal scratch']
  %s0 = inlined_call_operand.vmem [shape: f32[8,3], index: 0, kind: input, shape index: {}]
  %s1 = inlined_call_operand.vmem [shape: f32[8,1], index: 1, kind: input, shape index: {}]
  %s2 = inlined_call_operand.vmem [shape: f32[16,128], index: 2, kind: input, shape index: {}]
  %s3 = inlined_call_operand.vmem [shape: bf16[128,128], index: 3, kind: input, shape index: {}]
  %s4 = inlined_call_operand.vmem [shape: bf16[128,64], index: 4, kind: input, shape index: {}]
  %s5 = inlined_call_operand.vmem [shape: f32[8,1], index: 5, kind: output, shape index: {}]
  %s6 = sld [smem:[#allocation0]]
  $region30: #{qnetwork_forward.1} parent=0
    _
  %s8 = ssub.s32 1, %s6
  %s9 = scalar_select 0, %s8, %s6
  // Predicated region
  $region2: #{qnetwork_forward.1} parent=0 // pred_check
    _
  $region3: #{qnetwork_forward.1} parent=0 // pred_check_branch
    %11 = sbr.rel (0) target = $region5
  $region4: #{qnetwork_forward.1} parent=0 // pred_region
    _
  $region5: #{qnetwork_forward.1} parent=0 // pred_fallthru
    _
  // Predicated region
  $region6: #{qnetwork_forward.1} parent=0 // pred_check
    _
  $region7: #{qnetwork_forward.1} parent=0 // pred_check_branch
    %13 = sbr.rel (0) target = $region9
  $region8: #{qnetwork_forward.1} parent=0 // pred_region
    _
  $region9: #{qnetwork_forward.1} parent=0 // pred_fallthru
    _
  // Predicated region
  $region10: #{qnetwork_forward.1} parent=0 // pred_check
    _
  $region11: #{qnetwork_forward.1} parent=0 // pred_check_branch
    %15 = sbr.rel (0) target = $region13
  $region12: #{qnetwork_forward.1} parent=0 // pred_region
    _
  $region13: #{qnetwork_forward.1} parent=0 // pred_fallthru
    _
  // Predicated region
  $region14: #{qnetwork_forward.1} parent=0 // pred_check
    _
  $region15: #{qnetwork_forward.1} parent=0 // pred_check_branch
    %17 = sbr.rel (0) target = $region17
  $region16: #{qnetwork_forward.1} parent=0 // pred_region
    _
  $region17: #{qnetwork_forward.1} parent=0 // pred_fallthru
    _
  // Predicated region
  $region18: #{qnetwork_forward.1} parent=0 // pred_check
    _
  $region19: #{qnetwork_forward.1} parent=0 // pred_check_branch
    %19 = sbr.rel (0) target = $region21
  $region20: #{qnetwork_forward.1} parent=0 // pred_region
    _
  $region21: #{qnetwork_forward.1} parent=0 // pred_fallthru
    _
  %v21 = vld [vmem:[%s0] sm:$0xff]
  %v22 = vld [vmem:[%s1] sm:$0xff]
  %v23 = vld [vmem:[%s2] sm:$0xff]
  %v24 = vld [vmem:[%s2 + $0x8] sm:$0xff]
  %26 = vset.pattern.permute.xlu0 0
  %27 = vperm.xlu0 %26, %v21
  %v28 = vpop.permute.xlu0 %27
  %v30 = vlaneseq
  %v31 = vshrl.u32 %v30, 7
  %v32 = vsub.s32 0, %v31
  %v33 = vrot.slane %v23, %v32
  %v34 = vmul.f32 %v28, %v33
  %35 = vset.pattern.permute.xlu0 1
  %36 = vperm.xlu0 %35, %v21
  %v37 = vpop.permute.xlu0 %36
  %v39 = vlaneseq
  %v40 = vshrl.u32 %v39, 7
  %v41 = vsub.s32 1, %v40
  %v42 = vrot.slane %v23, %v41
  %v43 = vmul.f32 %v37, %v42
  %v44 = vadd.f32 %v34, %v43
  %45 = vset.pattern.permute.xlu0 2
  %46 = vperm.xlu0 %45, %v21
  %v47 = vpop.permute.xlu0 %46
  %v49 = vlaneseq
  %v50 = vshrl.u32 %v49, 7
  %v51 = vsub.s32 2, %v50
  %v52 = vrot.slane %v23, %v51
  %v53 = vmul.f32 %v47, %v52
  %v54 = vadd.f32 %v44, %v53
  %56 = vset.pattern.permute.xlu0 0
  %57 = vperm.xlu0 %56, %v22
  %v58 = vpop.permute.xlu0 %57
  %v60 = vlaneseq
  %v61 = vshrl.u32 %v60, 7
  %v62 = vsub.s32 3, %v61
  %v63 = vrot.slane %v23, %v62
  %v64 = vmul.f32 %v58, %v63
  %v65 = vadd.f32 %v54, %v64
  %v66 = vlaneseq
  %v67 = vshrl.u32 %v66, 7
  %v68 = vsub.s32 4, %v67
  %v69 = vrot.slane %v23, %v68
  %v70 = vadd.f32 %v65, %v69
  %v71 = vmax.f32 %v70, 0.0
  %v72 = vpack.c.bf16 %v71, %v71
  %v73 = vld [vmem:[%s3] sm:$0xf]
  %v74 = vld [vmem:[%s3 + $0x4] sm:$0xf]
  %v75 = vld [vmem:[%s3 + $0x8] sm:$0xf]
  %v76 = vld [vmem:[%s3 + $0xc] sm:$0xf]
  %v77 = vld [vmem:[%s3 + $0x10] sm:$0xf]
  %v78 = vld [vmem:[%s3 + $0x14] sm:$0xf]
  %v79 = vld [vmem:[%s3 + $0x18] sm:$0xf]
  %v80 = vld [vmem:[%s3 + $0x1c] sm:$0xf]
  %v81 = vld [vmem:[%s3 + $0x20] sm:$0xf]
  %v82 = vld [vmem:[%s3 + $0x24] sm:$0xf]
  %v83 = vld [vmem:[%s3 + $0x28] sm:$0xf]
  %v84 = vld [vmem:[%s3 + $0x2c] sm:$0xf]
  %v85 = vld [vmem:[%s3 + $0x30] sm:$0xf]
  %v86 = vld [vmem:[%s3 + $0x34] sm:$0xf]
  %v87 = vld [vmem:[%s3 + $0x38] sm:$0xf]
  %v88 = vld [vmem:[%s3 + $0x3c] sm:$0xf]
  %v89 = vlaneseq
  %v90 = vshrl.u32 %v89, 7
  %v91 = vsub.s32 5, %v90
  %v92 = vrot.slane %v23, %v91
  %v109 = vunpack.c.l.b16 %v73
  %v110 = vunpack.c.l.b16 %v74
  %v111 = vunpack.c.l.b16 %v75
  %v112 = vunpack.c.l.b16 %v76
  %v113 = vunpack.c.l.b16 %v77
  %v114 = vunpack.c.l.b16 %v78
  %v115 = vunpack.c.l.b16 %v79
  %v116 = vunpack.c.l.b16 %v80
  %v117 = vunpack.c.l.b16 %v81
  %v118 = vunpack.c.l.b16 %v82
  %v119 = vunpack.c.l.b16 %v83
  %v120 = vunpack.c.l.b16 %v84
  %v121 = vunpack.c.l.b16 %v85
  %v122 = vunpack.c.l.b16 %v86
  %v123 = vunpack.c.l.b16 %v87
  %v124 = vunpack.c.l.b16 %v88
  %v125 = vpack.c.b16 %v110, %v109
  %v126 = vpack.c.b16 %v112, %v111
  %v127 = vpack.c.b16 %v114, %v113
  %v128 = vpack.c.b16 %v116, %v115
  %v129 = vpack.c.b16 %v118, %v117
  %v130 = vpack.c.b16 %v120, %v119
  %v131 = vpack.c.b16 %v122, %v121
  %v132 = vpack.c.b16 %v124, %v123
  %141 = vmatprep.subr.bf16.mxu0 0
  %142 = vmatpush1.bf16.msra.mxu0 %v125
  %143 = vmatprep.subr.bf16.mxu0 0
  %144 = vmatpush1.bf16.msra.mxu0 %v126
  %145 = vmatprep.subr.bf16.mxu0 0
  %146 = vmatpush1.bf16.msra.mxu0 %v127
  %147 = vmatprep.subr.bf16.mxu0 0
  %148 = vmatpush1.bf16.msra.mxu0 %v128
  %149 = vmatprep.subr.bf16.mxu0 0
  %150 = vmatpush1.bf16.msra.mxu0 %v129
  %151 = vmatprep.subr.bf16.mxu0 0
  %152 = vmatpush1.bf16.msra.mxu0 %v130
  %153 = vmatprep.subr.bf16.mxu0 0
  %154 = vmatpush1.bf16.msra.mxu0 %v131
  %155 = vmatprep.subr.bf16.mxu0 0
  %156 = vmatpush1.bf16.msra.mxu0 %v132
  %157 = vmatprep.subr.bf16.mxu0 0
  %158 = vmatpush1.bf16.msra.mxu0 0
  %159 = vmatprep.subr.bf16.mxu0 0
  %160 = vmatpush1.bf16.msra.mxu0 0
  %161 = vmatprep.subr.bf16.mxu0 0
  %162 = vmatpush1.bf16.msra.mxu0 0
  %163 = vmatprep.subr.bf16.mxu0 0
  %164 = vmatpush1.bf16.msra.mxu0 0
  %165 = vmatprep.subr.bf16.mxu0 0
  %166 = vmatpush1.bf16.msra.mxu0 0
  %167 = vmatprep.subr.bf16.mxu0 0
  %168 = vmatpush1.bf16.msra.mxu0 0
  %169 = vmatprep.subr.bf16.mxu0 0
  %170 = vmatpush1.bf16.msra.mxu0 0
  %171 = vmatprep.subr.bf16.mxu0 0
  %172 = vmatpush1.bf16.msra.mxu0 0
  %173 = vmatprep.mubr.bf16.mxu0 0
  %174 = vmatmul.mubr.bf16.gmra.mrb[0].mxu0 %v72
  %v175 = vpop.f32.mrb[0].mxu0
  %v176 = vadd.f32 %v92, %v175
  %v177 = vpop.f32.mrb[0].mxu0
  %v178 = vpop.f32.mrb[0].mxu0
  %v179 = vpop.f32.mrb[0].mxu0
  %180 = vdwg.mxu0
  %v181 = vmax.f32 %v176, 0.0
  %v182 = vpack.c.bf16 %v181, %v181
  %v183 = vld [vmem:[%s4] sm:$0xf]
  %v184 = vld [vmem:[%s4 + $0x4] sm:$0xf]
  %v185 = vld [vmem:[%s4 + $0x8] sm:$0xf]
  %v186 = vld [vmem:[%s4 + $0xc] sm:$0xf]
  %v187 = vld [vmem:[%s4 + $0x10] sm:$0xf]
  %v188 = vld [vmem:[%s4 + $0x14] sm:$0xf]
  %v189 = vld [vmem:[%s4 + $0x18] sm:$0xf]
  %v190 = vld [vmem:[%s4 + $0x1c] sm:$0xf]
  %v191 = vld [vmem:[%s4 + $0x20] sm:$0xf]
  %v192 = vld [vmem:[%s4 + $0x24] sm:$0xf]
  %v193 = vld [vmem:[%s4 + $0x28] sm:$0xf]
  %v194 = vld [vmem:[%s4 + $0x2c] sm:$0xf]
  %v195 = vld [vmem:[%s4 + $0x30] sm:$0xf]
  %v196 = vld [vmem:[%s4 + $0x34] sm:$0xf]
  %v197 = vld [vmem:[%s4 + $0x38] sm:$0xf]
  %v198 = vld [vmem:[%s4 + $0x3c] sm:$0xf]
  %v199 = vlaneseq
  %v200 = vshrl.u32 %v199, 7
  %v201 = vsub.s32 6, %v200
  %v202 = vrot.slane %v23, %v201
  %v219 = vunpack.c.l.b16 %v183
  %v220 = vunpack.c.l.b16 %v184
  %v221 = vunpack.c.l.b16 %v185
  %v222 = vunpack.c.l.b16 %v186
  %v223 = vunpack.c.l.b16 %v187
  %v224 = vunpack.c.l.b16 %v188
  %v225 = vunpack.c.l.b16 %v189
  %v226 = vunpack.c.l.b16 %v190
  %v227 = vunpack.c.l.b16 %v191
  %v228 = vunpack.c.l.b16 %v192
  %v229 = vunpack.c.l.b16 %v193
  %v230 = vunpack.c.l.b16 %v194
  %v231 = vunpack.c.l.b16 %v195
  %v232 = vunpack.c.l.b16 %v196
  %v233 = vunpack.c.l.b16 %v197
  %v234 = vunpack.c.l.b16 %v198
  %v235 = vpack.c.b16 %v220, %v219
  %v236 = vpack.c.b16 %v222, %v221
  %v237 = vpack.c.b16 %v224, %v223
  %v238 = vpack.c.b16 %v226, %v225
  %v239 = vpack.c.b16 %v228, %v227
  %v240 = vpack.c.b16 %v230, %v229
  %v241 = vpack.c.b16 %v232, %v231
  %v242 = vpack.c.b16 %v234, %v233
  %251 = vmatprep.subr.bf16.mxu0 0
  %252 = vmatpush1.bf16.msra.mxu0 %v235
  %253 = vmatprep.subr.bf16.mxu0 0
  %254 = vmatpush1.bf16.msra.mxu0 %v236
  %255 = vmatprep.subr.bf16.mxu0 0
  %256 = vmatpush1.bf16.msra.mxu0 %v237
  %257 = vmatprep.subr.bf16.mxu0 0
  %258 = vmatpush1.bf16.msra.mxu0 %v238
  %259 = vmatprep.subr.bf16.mxu0 0
  %260 = vmatpush1.bf16.msra.mxu0 %v239
  %261 = vmatprep.subr.bf16.mxu0 0
  %262 = vmatpush1.bf16.msra.mxu0 %v240
  %263 = vmatprep.subr.bf16.mxu0 0
  %264 = vmatpush1.bf16.msra.mxu0 %v241
  %265 = vmatprep.subr.bf16.mxu0 0
  %266 = vmatpush1.bf16.msra.mxu0 %v242
  %267 = vmatprep.subr.bf16.mxu0 0
  %268 = vmatpush1.bf16.msra.mxu0 0
  %269 = vmatprep.subr.bf16.mxu0 0
  %270 = vmatpush1.bf16.msra.mxu0 0
  %271 = vmatprep.subr.bf16.mxu0 0
  %272 = vmatpush1.bf16.msra.mxu0 0
  %273 = vmatprep.subr.bf16.mxu0 0
  %274 = vmatpush1.bf16.msra.mxu0 0
  %275 = vmatprep.subr.bf16.mxu0 0
  %276 = vmatpush1.bf16.msra.mxu0 0
  %277 = vmatprep.subr.bf16.mxu0 0
  %278 = vmatpush1.bf16.msra.mxu0 0
  %279 = vmatprep.subr.bf16.mxu0 0
  %280 = vmatpush1.bf16.msra.mxu0 0
  %281 = vmatprep.subr.bf16.mxu0 0
  %282 = vmatpush1.bf16.msra.mxu0 0
  %283 = vmatprep.mubr.bf16.mxu0 0
  %284 = vmatmul.mubr.bf16.gmra.mrb[0].mxu0 %v182
  %v285 = vpop.f32.mrb[0].mxu0
  %v286 = vadd.f32 %v202, %v285
  %v287 = vpop.f32.mrb[0].mxu0
  %v288 = vpop.f32.mrb[0].mxu0
  %v289 = vpop.f32.mrb[0].mxu0
  %290 = vdwg.mxu0
  %v291 = vmax.f32 %v286, 0.0
  %v292 = vlaneseq
  %v293 = vshrl.u32 %v292, 7
  %v294 = vsub.s32 7, %v293
  %v295 = vrot.slane %v23, %v294
  %v296 = vmul.f32 %v291, %v295
  %vm297 = vcmask 523264
  %v298 = vsel %vm297, %v296, 0.0
  %299 = vadd.xlane.f32.xlu0 %v298
  %v300 = vpop.xlane.xlu0 %299
  %v301 = vlaneseq
  %v302 = vshrl.u32 %v301, 7
  %v303 = vsub.s32 0, %v302
  %v304 = vrot.slane %v24, %v303
  %v305 = vadd.f32 %v300, %v304
  %vm306 = vcmask 7168
  %307 = vst.msk [vmem:[%s5] sm:$0xff] %vm306, %v305
  // Predicated region
  $region22: #{qnetwork_forward.1} parent=0 // pred_check
    _
  $region23: #{qnetwork_forward.1} parent=0 // pred_check_branch
    %309 = sbr.rel (0) target = $region25
  $region24: #{qnetwork_forward.1} parent=0 // pred_region
    _
  $region25: #{qnetwork_forward.1} parent=0 // pred_fallthru
    _
  // Predicated region
  $region26: #{qnetwork_forward.1} parent=0 // pred_check
    _
  $region27: #{qnetwork_forward.1} parent=0 // pred_check_branch
    %311 = sbr.rel (0) target = $region29
  $region28: #{qnetwork_forward.1} parent=0 // pred_region
    _
  $region29: #{qnetwork_forward.1} parent=0 // pred_fallthru
    _

</llo_original>
